<compile_context>
chip_gen: v5e
topology: v5e:2x2
jax: 0.10.0
libtpu: 0.0.40
codegen_flags: <defaults>
</compile_context>

<pallas_src>
import functools

import jax
import jax.numpy as jnp
from jax.experimental import pallas as pl
from jax.experimental.pallas import tpu as pltpu


def _round_up(v, m):
    return (v + m - 1) // m * m


def _gsa_kernel(off_ref,                       # [B+1] int32 row offsets (SMEM)
                xf_ref,                        # [tile_n, C+4] bf16 (x|pos|1)
                w1_ref, w2_ref, b2_ref, w3_ref, b3_ref,
                out_ref,                       # [B_pad, H3p] f32 resident max
                *, num_graphs):
    """Per tile: fused 3-layer MLP, then overlap-guarded segment max."""
    tile_n = xf_ref.shape[0]
    p = pl.program_id(0)
    i = pl.program_id(1)
    tile_start = (p * pl.num_programs(1) + i) * tile_n
    tile_end = tile_start + tile_n

    # Init the resident running-max accumulator on the first tile of this
    # partial slab (identity 0 is valid: h is post-ReLU, so h >= 0).
    @pl.when(i == 0)
    def _():
        out_ref[...] = jnp.zeros_like(out_ref)

    # --- MLP: bf16 MXU matmuls, f32 accumulation, f32 bias+ReLU ------------
    # Layer 1: b1 is folded into w1 via the ones column of xf (no bias add).
    h = jnp.dot(xf_ref[...], w1_ref[...], preferred_element_type=jnp.float32)
    h = jnp.maximum(h, 0.0)
    h = jnp.dot(h.astype(jnp.bfloat16), w2_ref[...],
                preferred_element_type=jnp.float32) + b2_ref[...]
    h = jnp.maximum(h, 0.0)
    h = jnp.dot(h.astype(jnp.bfloat16), w3_ref[...],
                preferred_element_type=jnp.float32) + b3_ref[...]
    h = jnp.maximum(h, 0.0)                                  # [tile_n, H3p] f32

    # --- segment max: only graphs overlapping this tile do any work --------
    rows = tile_start + jax.lax.broadcasted_iota(jnp.int32, (tile_n, 1), 0)
    # Small static unroll over graphs (B is small and static here).
    # TODO(synk): for B in the tens switch to lax.fori_loop + pl.ds(b, 1).
    for b in range(num_graphs):
        lo = off_ref[b]
        hi = off_ref[b + 1]

        @pl.when(jnp.logical_and(lo < tile_end, hi > tile_start))
        def _(b=b, lo=lo, hi=hi):
            mask = jnp.logical_and(rows >= lo, rows < hi)    # [tile_n, 1]
            row_max = jnp.max(jnp.where(mask, h, 0.0), axis=0, keepdims=True)
            cur = out_ref[pl.ds(b, 1), :]
            out_ref[pl.ds(b, 1), :] = jnp.maximum(cur, row_max)


def _default_num_partials():
    # 2 partial slabs only on v7x (2 TensorCores per chip); on single-core
    # v5e / v6e the extra "parallel" axis is just a serial loop + overhead.
    try:
        kind = jax.devices()[0].device_kind.lower()
    except Exception:
        return 1
    return 2 if ("v7" in kind or "7x" in kind) else 1


def global_sa_module(x, pos, batch, params, num_graphs, *,
                     tile_n=512, num_partials=None):
    """JAX wrapper: fuse/pad inputs, launch the gridded kernel, combine."""
    if num_partials is None:
        num_partials = _default_num_partials()

    w1, b1, w2, b2, w3, b3 = params
    N, C = x.shape
    H1, H2, H3 = w1.shape[1], w2.shape[1], w3.shape[1]
    H1p, H2p, H3p = (_round_up(h, 128) for h in (H1, H2, H3))
    Bp = _round_up(num_graphs, 8)
    bf = jnp.bfloat16

    # Fold b1 into w1 (extra row, matched by the ones column of xf); pad
    # hidden widths to lane-dense multiples of 128 (exact: padded cols are 0).
    w1f = jnp.pad(jnp.concatenate([w1, b1], axis=0),
                  ((0, 0), (0, H1p - H1))).astype(bf)        # [C+4, H1p]
    w2p = jnp.pad(w2, ((0, H1p - H1), (0, H2p - H2))).astype(bf)
    b2p = jnp.pad(b2, ((0, 0), (0, H2p - H2))).astype(jnp.float32)
    w3p = jnp.pad(w3, ((0, H2p - H2), (0, H3p - H3))).astype(bf)
    b3p = jnp.pad(b3, ((0, 0), (0, H3p - H3))).astype(jnp.float32)

    # Row tiling (bf16 -> keep the sublane dim a multiple of 16); pad N so
    # the (num_partials, tiles_per_part) grid divides it evenly.
    tile_n = max(16, min(_round_up(tile_n, 16), _round_up(N, 16)))
    n_pad = _round_up(N, tile_n * num_partials)
    tiles_per_part = n_pad // (tile_n * num_partials)

    # Fused (x | pos | 1) operand; the ones column carries b1.  Padded rows
    # are all-zero and never fall inside any graph's row range below.
    xf = jnp.concatenate(
        [x.astype(bf), pos.astype(bf), jnp.ones((N, 1), bf)], axis=1)
    xf = jnp.pad(xf, ((0, n_pad - N), (0, 0)))               # [n_pad, C+4]
    Kf = xf.shape[1]

    # Per-graph row offsets (batch sorted — PyG invariant); scalar-prefetched
    # into SMEM, replacing the per-row int32 ids VMEM block entirely.
    offsets = jnp.searchsorted(
        batch.astype(jnp.int32),
        jnp.arange(num_graphs + 1, dtype=jnp.int32)).astype(jnp.int32)

    row = lambda p, i, off: (p * tiles_per_part + i, 0)
    rep = lambda p, i, off: (0, 0)

    out_parts = pl.pallas_call(
        functools.partial(_gsa_kernel, num_graphs=num_graphs),
        out_shape=jax.ShapeDtypeStruct((num_partials, Bp, H3p), jnp.float32),
        grid_spec=pltpu.PrefetchScalarGridSpec(
            num_scalar_prefetch=1,
            grid=(num_partials, tiles_per_part),
            in_specs=[
                pl.BlockSpec((tile_n, Kf), row),     # fused (x|pos|1) tile
                pl.BlockSpec((Kf, H1p), rep),        # w1 (+ folded b1 row)
                pl.BlockSpec((H1p, H2p), rep),       # w2
                pl.BlockSpec((1, H2p), rep),         # b2
                pl.BlockSpec((H2p, H3p), rep),       # w3
                pl.BlockSpec((1, H3p), rep),         # b3
            ],
            out_specs=pl.BlockSpec((None, Bp, H3p),
                                   lambda p, i, off: (p, 0, 0)),
        ),
        compiler_params=pltpu.CompilerParams(
            dimension_semantics=("parallel", "arbitrary"),
            vmem_limit_bytes=32 * 1024 * 1024),
    )(offsets, xf, w1f, w2p, b2p, w3p, b3p)

    # Combine per-core partial maxes (valid: h >= 0), strip graph/channel pad.
    out = jnp.max(out_parts, axis=0)[:num_graphs, :H3]

    pos_out = jnp.zeros((num_graphs, 3), dtype=pos.dtype)
    batch_out = jnp.arange(num_graphs, dtype=batch.dtype)
    return out, pos_out, batch_out


def _make_params(key, dims):
    """Deterministic Linear params; weights stored as [C_in, C_out]."""
    params = []
    for i in range(len(dims) - 1):
        kw, kb, key = jax.random.split(key, 3)
        w = 0.1 * jax.random.normal(kw, (dims[i], dims[i + 1]), jnp.float32)
        b = 0.1 * jax.random.normal(kb, (1, dims[i + 1]), jnp.float32)
        params += [w, b]
    return tuple(params)


def _reference(x, pos, batch, params, num_graphs):
    """Pure-JAX reference (same bf16 quantization as the kernel)."""
    w1, b1, w2, b2, w3, b3 = params
    bf, f32 = jnp.bfloat16, jnp.float32
    h = jnp.concatenate([x, pos], axis=1).astype(bf)
    h = jnp.maximum(jnp.dot(h, w1.astype(bf), preferred_element_type=f32)
                    + b1.astype(bf).astype(f32), 0.0)
    h = jnp.maximum(jnp.dot(h.astype(bf), w2.astype(bf),
                            preferred_element_type=f32) + b2, 0.0)
    h = jnp.maximum(jnp.dot(h.astype(bf), w3.astype(bf),
                            preferred_element_type=f32) + b3, 0.0)
    onehot = batch[None, :] == jnp.arange(num_graphs)[:, None]   # [B, N]
    return jnp.max(jnp.where(onehot[:, :, None], h[None, :, :], 0.0), axis=1)


if __name__ == "__main__":
    key = jax.random.PRNGKey(0)
    k_x, k_pos, k_par = jax.random.split(key, 3)

    N = 64            # total points
    C = 4             # point feature channels
    B = 2             # graphs in the batch
    DIMS = (C + 3, 32, 64, 128)   # self.nn = MLP([C+3, 32, 64, 128])

    x = jax.random.normal(k_x, (N, C), jnp.float32)
    pos = jax.random.normal(k_pos, (N, 3), jnp.float32)
    # Uneven, sorted graph assignment (24 / 40 points) so a tile straddles a
    # graph boundary and the overlap-guarded pooling path is exercised.
    batch = jnp.concatenate([jnp.zeros((24,), jnp.int32),
                             jnp.ones((40,), jnp.int32)])

    params = _make_params(k_par, DIMS)

    # tile_n=16, num_partials=2 so the toy problem runs a real 2x2 grid
    # (parallel partials x reduction tiles); defaults are 512 / auto-detect.
    out, pos_out, batch_out = global_sa_module(
        x, pos, batch, params, B, tile_n=16, num_partials=2)
    out = jax.block_until_ready(out)

    ref = _reference(x, pos, batch, params, B)
    assert out.shape == (B, DIMS[-1])
    assert pos_out.shape == (B, 3)
    assert batch_out.shape == (B,)
    assert jnp.allclose(out, ref, atol=1e-3, rtol=1e-3)

    print("KERNEL_OK")
</pallas_src>

<mosaic_0001>
module attributes {stable_mosaic.version = 11 : i64} {
  func.func @_gsa_kernel(%arg0: i32, %arg1: i32, %arg2: memref<3xi32, #tpu.memory_space<smem>>, %arg3: memref<16x8xbf16, #tpu.memory_space<vmem>>, %arg4: memref<8x128xbf16, #tpu.memory_space<vmem>>, %arg5: memref<128x128xbf16, #tpu.memory_space<vmem>>, %arg6: memref<1x128xf32, #tpu.memory_space<vmem>>, %arg7: memref<128x128xbf16, #tpu.memory_space<vmem>>, %arg8: memref<1x128xf32, #tpu.memory_space<vmem>>, %arg9: memref<1x8x128xf32, #tpu.memory_space<vmem>>) attributes {dimension_semantics = [#tpu.dimension_semantics<parallel>, #tpu.dimension_semantics<arbitrary>], iteration_bounds = array<i64: 2, 2>, scalar_prefetch = 1 : i64, scratch_operands = 0 : i64, tpu.core_type = #tpu.core_type<tc>, window_params = [{transform_indices = @transform_0, window_bounds = array<i64: 16, 8>}, {pipeline_mode = #tpu.pipeline_mode<synchronous>, transform_indices = @transform_1, window_bounds = array<i64: 8, 128>}, {pipeline_mode = #tpu.pipeline_mode<synchronous>, transform_indices = @transform_2, window_bounds = array<i64: 128, 128>}, {pipeline_mode = #tpu.pipeline_mode<synchronous>, transform_indices = @transform_3, window_bounds = array<i64: 1, 128>}, {pipeline_mode = #tpu.pipeline_mode<synchronous>, transform_indices = @transform_4, window_bounds = array<i64: 128, 128>}, {pipeline_mode = #tpu.pipeline_mode<synchronous>, transform_indices = @transform_5, window_bounds = array<i64: 1, 128>}, {transform_indices = @transform_6, window_bounds = array<i64: 1, 8, 128>}]} {
    %c2_i32 = arith.constant 2 : i32
    %0 = arith.muli %arg0, %c2_i32 : i32
    %1 = arith.addi %0, %arg1 : i32
    %c16_i32 = arith.constant 16 : i32
    %2 = arith.muli %1, %c16_i32 : i32
    %c16_i32_0 = arith.constant 16 : i32
    %3 = arith.addi %2, %c16_i32_0 : i32
    %c0_i32 = arith.constant 0 : i32
    %4 = arith.cmpi eq, %arg1, %c0_i32 : i32
    %5 = arith.extui %4 : i1 to i32
    %c0_i32_1 = arith.constant 0 : i32
    %6 = arith.cmpi ne, %5, %c0_i32_1 : i32
    scf.if %6 {
      %cst_22 = arith.constant 0.000000e+00 : f32
      %45 = vector.broadcast %cst_22 : f32 to vector<8x128xf32>
      %c0_23 = arith.constant 0 : index
      %c0_24 = arith.constant 0 : index
      %c0_25 = arith.constant 0 : index
      %46 = vector.load %arg9[%c0_23, %c0_24, %c0_25] : memref<1x8x128xf32, #tpu.memory_space<vmem>>, vector<1x8x128xf32>
      %47 = vector.shape_cast %46 : vector<1x8x128xf32> to vector<8x128xf32>
      %48 = vector.shape_cast %45 : vector<8x128xf32> to vector<1x8x128xf32>
      tpu.vector_store %arg9[%c0_23, %c0_24, %c0_25], %48 {strides = array<i32>} : memref<1x8x128xf32, #tpu.memory_space<vmem>>, vector<1x8x128xf32>,
    } else {
    }
    %c0 = arith.constant 0 : index
    %c0_2 = arith.constant 0 : index
    %7 = vector.load %arg3[%c0, %c0_2] : memref<16x8xbf16, #tpu.memory_space<vmem>>, vector<16x8xbf16>
    %c0_3 = arith.constant 0 : index
    %c0_4 = arith.constant 0 : index
    %8 = vector.load %arg4[%c0_3, %c0_4] : memref<8x128xbf16, #tpu.memory_space<vmem>>, vector<8x128xbf16>
    %cst = arith.constant dense<0.000000e+00> : vector<16x128xf32>
    %9 = tpu.matmul %7, %8, %cst {dimension_numbers = #tpu.dot_dimension_numbers<[1], [0], [0], [1], [0, 0, 1, 1], [], []>} : vector<16x8xbf16>, vector<8x128xbf16>, vector<16x128xf32> -> vector<16x128xf32>
    %cst_5 = arith.constant 0.000000e+00 : f32
    %10 = vector.broadcast %cst_5 : f32 to vector<16x128xf32>
    %11 = arith.maximumf %9, %10 : vector<16x128xf32>
    %12 = arith.truncf %11 : vector<16x128xf32> to vector<16x128xbf16>
    %c0_6 = arith.constant 0 : index
    %c0_7 = arith.constant 0 : index
    %13 = vector.load %arg5[%c0_6, %c0_7] : memref<128x128xbf16, #tpu.memory_space<vmem>>, vector<128x128xbf16>
    %cst_8 = arith.constant dense<0.000000e+00> : vector<16x128xf32>
    %14 = tpu.matmul %12, %13, %cst_8 {dimension_numbers = #tpu.dot_dimension_numbers<[1], [0], [0], [1], [0, 0, 1, 1], [], []>} : vector<16x128xbf16>, vector<128x128xbf16>, vector<16x128xf32> -> vector<16x128xf32>
    %c0_9 = arith.constant 0 : index
    %c0_10 = arith.constant 0 : index
    %15 = vector.load %arg6[%c0_9, %c0_10] : memref<1x128xf32, #tpu.memory_space<vmem>>, vector<1x128xf32>
    %16 = vector.broadcast %15 : vector<1x128xf32> to vector<16x128xf32>
    %17 = arith.addf %14, %16 : vector<16x128xf32>
    %cst_11 = arith.constant 0.000000e+00 : f32
    %18 = vector.broadcast %cst_11 : f32 to vector<16x128xf32>
    %19 = arith.maximumf %17, %18 : vector<16x128xf32>
    %20 = arith.truncf %19 : vector<16x128xf32> to vector<16x128xbf16>
    %c0_12 = arith.constant 0 : index
    %c0_13 = arith.constant 0 : index
    %21 = vector.load %arg7[%c0_12, %c0_13] : memref<128x128xbf16, #tpu.memory_space<vmem>>, vector<128x128xbf16>
    %cst_14 = arith.constant dense<0.000000e+00> : vector<16x128xf32>
    %22 = tpu.matmul %20, %21, %cst_14 {dimension_numbers = #tpu.dot_dimension_numbers<[1], [0], [0], [1], [0, 0, 1, 1], [], []>} : vector<16x128xbf16>, vector<128x128xbf16>, vector<16x128xf32> -> vector<16x128xf32>
    %c0_15 = arith.constant 0 : index
    %c0_16 = arith.constant 0 : index
    %23 = vector.load %arg8[%c0_15, %c0_16] : memref<1x128xf32, #tpu.memory_space<vmem>>, vector<1x128xf32>
    %24 = vector.broadcast %23 : vector<1x128xf32> to vector<16x128xf32>
    %25 = arith.addf %22, %24 : vector<16x128xf32>
    %cst_17 = arith.constant 0.000000e+00 : f32
    %26 = vector.broadcast %cst_17 : f32 to vector<16x128xf32>
    %27 = arith.maximumf %25, %26 : vector<16x128xf32>
    %28 = tpu.iota {dimensions = array<i32: 0>} : vector<16x1xi32>
    %29 = vector.broadcast %2 : i32 to vector<16x1xi32>
    %30 = arith.addi %29, %28 : vector<16x1xi32>
    %c0_18 = arith.constant 0 : index
    %31 = memref.load %arg2[%c0_18] : memref<3xi32, #tpu.memory_space<smem>>
    %c1 = arith.constant 1 : index
    %32 = memref.load %arg2[%c1] : memref<3xi32, #tpu.memory_space<smem>>
    %33 = arith.cmpi slt, %31, %3 : i32
    %34 = arith.cmpi sgt, %32, %2 : i32
    %35 = arith.andi %33, %34 : i1
    %36 = arith.extui %35 : i1 to i32
    %c0_i32_19 = arith.constant 0 : i32
    %37 = arith.cmpi ne, %36, %c0_i32_19 : i32
    scf.if %37 {
      %45 = vector.broadcast %31 : i32 to vector<16x1xi32>
      %46 = arith.cmpi sge, %30, %45 : vector<16x1xi32>
      %47 = vector.broadcast %32 : i32 to vector<16x1xi32>
      %48 = arith.cmpi slt, %30, %47 : vector<16x1xi32>
      %49 = arith.andi %46, %48 : vector<16x1xi1>
      %cst_22 = arith.constant 0.000000e+00 : f32
      %50 = vector.shape_cast %49 : vector<16x1xi1> to vector<16x1xi1>
      %51 = vector.broadcast %50 : vector<16x1xi1> to vector<16x128xi1>
      %52 = vector.broadcast %cst_22 : f32 to vector<16x128xf32>
      %53 = arith.select %51, %27, %52 : vector<16x128xi1>, vector<16x128xf32>
      %cst_23 = arith.constant dense<0xFF800000> : vector<128xf32>
      %54 = vector.multi_reduction <maximumf>, %53, %cst_23 [0] : vector<16x128xf32> to vector<128xf32>
      %55 = vector.shape_cast %54 : vector<128xf32> to vector<1x128xf32>
      %c0_24 = arith.constant 0 : index
      %c0_25 = arith.constant 0 : index
      %c0_26 = arith.constant 0 : index
      %56 = vector.load %arg9[%c0_24, %c0_25, %c0_26] : memref<1x8x128xf32, #tpu.memory_space<vmem>>, vector<1x1x128xf32>
      %57 = vector.shape_cast %56 : vector<1x1x128xf32> to vector<1x128xf32>
      %58 = arith.maximumf %57, %55 : vector<1x128xf32>
      %c0_27 = arith.constant 0 : index
      %c0_28 = arith.constant 0 : index
      %c0_29 = arith.constant 0 : index
      %59 = vector.load %arg9[%c0_27, %c0_28, %c0_29] : memref<1x8x128xf32, #tpu.memory_space<vmem>>, vector<1x1x128xf32>
      %60 = vector.shape_cast %59 : vector<1x1x128xf32> to vector<1x128xf32>
      %61 = vector.shape_cast %58 : vector<1x128xf32> to vector<1x1x128xf32>
      tpu.vector_store %arg9[%c0_27, %c0_28, %c0_29], %61 {strides = array<i32>} : memref<1x8x128xf32, #tpu.memory_space<vmem>>, vector<1x1x128xf32>,
    } else {
    }
    %c1_20 = arith.constant 1 : index
    %38 = memref.load %arg2[%c1_20] : memref<3xi32, #tpu.memory_space<smem>>
    %c2 = arith.constant 2 : index
    %39 = memref.load %arg2[%c2] : memref<3xi32, #tpu.memory_space<smem>>
    %40 = arith.cmpi slt, %38, %3 : i32
    %41 = arith.cmpi sgt, %39, %2 : i32
    %42 = arith.andi %40, %41 : i1
    %43 = arith.extui %42 : i1 to i32
    %c0_i32_21 = arith.constant 0 : i32
    %44 = arith.cmpi ne, %43, %c0_i32_21 : i32
    scf.if %44 {
      %45 = vector.broadcast %38 : i32 to vector<16x1xi32>
      %46 = arith.cmpi sge, %30, %45 : vector<16x1xi32>
      %47 = vector.broadcast %39 : i32 to vector<16x1xi32>
      %48 = arith.cmpi slt, %30, %47 : vector<16x1xi32>
      %49 = arith.andi %46, %48 : vector<16x1xi1>
      %cst_22 = arith.constant 0.000000e+00 : f32
      %50 = vector.shape_cast %49 : vector<16x1xi1> to vector<16x1xi1>
      %51 = vector.broadcast %50 : vector<16x1xi1> to vector<16x128xi1>
      %52 = vector.broadcast %cst_22 : f32 to vector<16x128xf32>
      %53 = arith.select %51, %27, %52 : vector<16x128xi1>, vector<16x128xf32>
      %cst_23 = arith.constant dense<0xFF800000> : vector<128xf32>
      %54 = vector.multi_reduction <maximumf>, %53, %cst_23 [0] : vector<16x128xf32> to vector<128xf32>
      %55 = vector.shape_cast %54 : vector<128xf32> to vector<1x128xf32>
      %c0_24 = arith.constant 0 : index
      %c1_25 = arith.constant 1 : index
      %c0_26 = arith.constant 0 : index
      %56 = vector.load %arg9[%c0_24, %c1_25, %c0_26] : memref<1x8x128xf32, #tpu.memory_space<vmem>>, vector<1x1x128xf32>
      %57 = vector.shape_cast %56 : vector<1x1x128xf32> to vector<1x128xf32>
      %58 = arith.maximumf %57, %55 : vector<1x128xf32>
      %c0_27 = arith.constant 0 : index
      %c1_28 = arith.constant 1 : index
      %c0_29 = arith.constant 0 : index
      %59 = vector.load %arg9[%c0_27, %c1_28, %c0_29] : memref<1x8x128xf32, #tpu.memory_space<vmem>>, vector<1x1x128xf32>
      %60 = vector.shape_cast %59 : vector<1x1x128xf32> to vector<1x128xf32>
      %61 = vector.shape_cast %58 : vector<1x128xf32> to vector<1x1x128xf32>
      tpu.vector_store %arg9[%c0_27, %c1_28, %c0_29], %61 {strides = array<i32>} : memref<1x8x128xf32, #tpu.memory_space<vmem>>, vector<1x1x128xf32>,
    } else {
    }
    return
  }
  func.func @transform_0(%arg0: i32, %arg1: i32, %arg2: memref<3xi32, #tpu.memory_space<smem>>) -> (i32, i32) {
    %c2_i32 = arith.constant 2 : i32
    %0 = arith.muli %arg0, %c2_i32 : i32
    %1 = arith.addi %0, %arg1 : i32
    %c0_i32 = arith.constant 0 : i32
    %c0_i32_0 = arith.constant 0 : i32
    return %1, %c0_i32 : i32, i32
  }
  func.func @transform_1(%arg0: i32, %arg1: i32, %arg2: memref<3xi32, #tpu.memory_space<smem>>) -> (i32, i32) {
    %c0_i32 = arith.constant 0 : i32
    %c0_i32_0 = arith.constant 0 : i32
    %c0_i32_1 = arith.constant 0 : i32
    return %c0_i32, %c0_i32_0 : i32, i32
  }
  func.func @transform_2(%arg0: i32, %arg1: i32, %arg2: memref<3xi32, #tpu.memory_space<smem>>) -> (i32, i32) {
    %c0_i32 = arith.constant 0 : i32
    %c0_i32_0 = arith.constant 0 : i32
    %c0_i32_1 = arith.constant 0 : i32
    return %c0_i32, %c0_i32_0 : i32, i32
  }
  func.func @transform_3(%arg0: i32, %arg1: i32, %arg2: memref<3xi32, #tpu.memory_space<smem>>) -> (i32, i32) {
    %c0_i32 = arith.constant 0 : i32
    %c0_i32_0 = arith.constant 0 : i32
    %c0_i32_1 = arith.constant 0 : i32
    return %c0_i32, %c0_i32_0 : i32, i32
  }
  func.func @transform_4(%arg0: i32, %arg1: i32, %arg2: memref<3xi32, #tpu.memory_space<smem>>) -> (i32, i32) {
    %c0_i32 = arith.constant 0 : i32
    %c0_i32_0 = arith.constant 0 : i32
    %c0_i32_1 = arith.constant 0 : i32
    return %c0_i32, %c0_i32_0 : i32, i32
  }
  func.func @transform_5(%arg0: i32, %arg1: i32, %arg2: memref<3xi32, #tpu.memory_space<smem>>) -> (i32, i32) {
    %c0_i32 = arith.constant 0 : i32
    %c0_i32_0 = arith.constant 0 : i32
    %c0_i32_1 = arith.constant 0 : i32
    return %c0_i32, %c0_i32_0 : i32, i32
  }
  func.func @transform_6(%arg0: i32, %arg1: i32, %arg2: memref<3xi32, #tpu.memory_space<smem>>) -> (i32, i32, i32) {
    %c0_i32 = arith.constant 0 : i32
    %c0_i32_0 = arith.constant 0 : i32
    %c0_i32_1 = arith.constant 0 : i32
    return %arg0, %c0_i32, %c0_i32_0 : i32, i32, i32
  }
}

</mosaic_0001>

<llo_original>
// kernel: tpu_custom_call.1
$region0: #{tpu_custom_call.1}
  #allocation0 [shape = 'u32[]', space=smem, size = 0x4, offset = 0x4, fixed_abs, tag = 'smem constant byte address 0x4 - core index']
  #allocation1 [shape = 'u32[72,128]{1,0:T(1,128)}', space=vmem, size = 0x9000, scoped, tag = 'internal scratch']
  #allocation2 [shape = 's32[1]{0}', space=sflag, size = 0x4, scoped, tag = 'scoped memory for tpu_custom_call.1']
  #allocation3 [shape = 'u8[512]{0}', space=smem, size = 0x200, scoped, tag = 'prefetched SMEM operand 0']
  %s0 = inlined_call_operand.vmem [shape: s32[3], index: 0, kind: input, shape index: {}]
  %s1 = inlined_call_operand.vmem [shape: bf16[64,8], index: 1, kind: input, shape index: {}]
  %s2 = inlined_call_operand.vmem [shape: bf16[8,128], index: 2, kind: input, shape index: {}]
  %s3 = inlined_call_operand.hbm [shape: bf16[128,128], index: 3, kind: input, shape index: {}]
  %s4 = inlined_call_operand.vmem [shape: f32[1,128], index: 4, kind: input, shape index: {}]
  %s5 = inlined_call_operand.hbm [shape: bf16[128,128], index: 5, kind: input, shape index: {}]
  %s6 = inlined_call_operand.vmem [shape: f32[1,128], index: 6, kind: input, shape index: {}]
  %s7 = inlined_call_operand.hbm [shape: f32[2,8,128], index: 7, kind: output, shape index: {}]
  %s8 = sld [smem:[#allocation0]]
  $region77: #{tpu_custom_call.1} parent=0
    _
  %s10 = ssub.s32 1, %s8
  %s11 = scalar_select 0, %s10, %s8
  %s13 = sshll.u32 %s0, 4
  %s14 = int_to_ptr.vmem [resolvable:$true] %s13
  %16 = dma.vmem_to_smem %s14, 16, [#allocation3], [#allocation2]
  %18 = dma.done [#allocation2], 16
  %19 = sfence
  $region1: #{tpu_custom_call.1} parent=0
    #allocation4 [shape = 'u8[32768]{0}', space=vmem, size = 0x8000, scoped, tag = 'input window, operand 3, single buffered']
    #allocation5 [shape = 's32[2]{0}', space=sflag, size = 0x8, scoped, tag = 'scoped memory for tpu_custom_call.1']
    #allocation6 [shape = 's32[2]{0}', space=sflag, size = 0x8, scoped, tag = 'scoped memory for tpu_custom_call.1']
    #allocation7 [shape = 'u8[32768]{0}', space=vmem, size = 0x8000, scoped, tag = 'input window, operand 5, single buffered']
    #allocation8 [shape = 's32[1]{0}', space=sflag, size = 0x4, scoped, tag = 'scoped memory for tpu_custom_call.1']
    #allocation9 [shape = 'u8[8192]{0}', space=vmem, size = 0x2000, scoped, tag = 'output window, operand 0']
    %20 = vsyncpa [#allocation5], 0
    %21 = vsyncpa [#allocation8], 0
    %22 = vsyncpa [#allocation6], 0
    %s23 = scalar_lea.sflag [#allocation6], 1
    %24 = vsyncpa %s23, 0
    loop: start=0, step=1, limit=6
    $region2: #{tpu_custom_call.1} parent=1 // loop_pre_header
      _
    $region3: #{tpu_custom_call.1} parent=1 // loop_header
      %s26 = sphi 0, %s30
      %p27 = scmp.ge.s32.totalorder %s26, 6
      %s33 = sphi 0, %s45
      %s34 = sphi 0, %s41
      %s35 = sphi 0, %s33
      %s36 = sphi 0, %s34
      %s37 = sphi 0, %s35
      %s38 = sphi 0, %s36
      %s52 = sphi 0, %s54
      %s55 = sphi 0, %s52
      %s56 = sphi 0, %s55
      %s72 = sphi 0, %s56
      %s76 = sphi 0, %s76
      %s78 = sphi 0, %s76
      %s79 = sphi 0, %s78
      %s93 = sphi 0, %s79
      %s97 = sphi 0, %s97
      %s99 = sphi 0, %s97
      %s100 = sphi 0, %s99
      %s114 = sphi 0, %s100
      %s118 = sphi 0, %s118
      %s120 = sphi 0, %s118
      %s121 = sphi 0, %s120
      %s135 = sphi 0, %s121
      %s139 = sphi 0, %s139
      %s141 = sphi 0, %s139
      %s142 = sphi 0, %s141
      %s156 = sphi 0, %s142
      %s160 = sphi 0, %s160
      %s162 = sphi 0, %s160
      %s163 = sphi 0, %s162
      %s177 = sphi 0, %s163
      %s183 = sphi 0, %s185
      %s186 = sphi 0, %s183
      %s187 = sphi 0, %s186
      %s203 = sphi 0, %s187
    $region4: #{tpu_custom_call.1} parent=1 // loop_header_branch
      %29 = sbr.rel (%p27) target = $region8
    $region5: #{tpu_custom_call.1} parent=1 // loop_body
      %s31 = ssub.s32 %s26, 1
      %s32 = ssub.s32 %s26, 2
      %s39 = sadd.s32 1, %s34
      %p40 = scmp.ge.s32.totalorder %s39, 2
      %s41 = scalar_select %p40, 0, %s39
      %s42 = sadd.s32 1, %s33
      %s43 = scalar_select %p40, %s42, %s33
      %p44 = scmp.ge.s32.totalorder %s43, 2
      %s45 = scalar_select %p44, 0, %s43
      %s46 = smul.u32 %s33, 2
      %s47 = sadd.s32 %s46, %s34
      %s48 = smul.u32 %s45, 2
      %s49 = sadd.s32 %s48, %s41
      %s50 = ssub.s32 %s47, %s49
      %p51 = scmp.eq.s32.totalorder %s50, 0
      %s53 = sadd.s32 %s52, 1
      %s54 = scalar_select %p51, %s52, %s53
      %p57 = pneg %p51
      %p58 = scmp.eq.s32.totalorder %s26, 3
      %p59 = por %p57, %p58
      %p60 = scmp.ne.s32.totalorder %s52, %s55
      %p61 = scmp.eq.s32.totalorder %s26, 0
      %p62 = por %p60, %p61
      %p63 = scmp.ne.s32.totalorder %s52, %s55
      %p64 = scmp.eq.s32.totalorder %s31, 3
      %p65 = por %p63, %p64
      %p66 = scmp.ne.s32.totalorder %s55, %s56
      %p67 = scmp.eq.s32.totalorder %s31, 0
      %p68 = por %p66, %p67
      %p69 = scmp.ne.s32.totalorder %s55, %s56
      %p70 = scmp.eq.s32.totalorder %s32, 3
      %p71 = por %p69, %p70
      %p73 = scmp.ne.s32.totalorder %s56, %s72
      %p74 = scmp.eq.s32.totalorder %s32, 0
      %p75 = por %p73, %p74
      %s77 = sadd.s32 %s76, 1
      %p80 = scmp.eq.s32.totalorder %s26, 3
      %p81 = scmp.ne.s32.totalorder %s76, %s78
      %p82 = scmp.eq.s32.totalorder %s26, 0
      %p83 = por %p81, %p82
      %p84 = scmp.ne.s32.totalorder %s76, %s78
      %p85 = scmp.eq.s32.totalorder %s31, 3
      %p86 = por %p84, %p85
      %p87 = scmp.ne.s32.totalorder %s78, %s79
      %p88 = scmp.eq.s32.totalorder %s31, 0
      %p89 = por %p87, %p88
      %p90 = scmp.ne.s32.totalorder %s78, %s79
      %p91 = scmp.eq.s32.totalorder %s32, 3
      %p92 = por %p90, %p91
      %p94 = scmp.ne.s32.totalorder %s79, %s93
      %p95 = scmp.eq.s32.totalorder %s32, 0
      %p96 = por %p94, %p95
      %s98 = sadd.s32 %s97, 1
      %p101 = scmp.eq.s32.totalorder %s26, 3
      %p102 = scmp.ne.s32.totalorder %s97, %s99
      %p103 = scmp.eq.s32.totalorder %s26, 0
      %p104 = por %p102, %p103
      %p105 = scmp.ne.s32.totalorder %s97, %s99
      %p106 = scmp.eq.s32.totalorder %s31, 3
      %p107 = por %p105, %p106
      %p108 = scmp.ne.s32.totalorder %s99, %s100
      %p109 = scmp.eq.s32.totalorder %s31, 0
      %p110 = por %p108, %p109
      %p111 = scmp.ne.s32.totalorder %s99, %s100
      %p112 = scmp.eq.s32.totalorder %s32, 3
      %p113 = por %p111, %p112
      %p115 = scmp.ne.s32.totalorder %s100, %s114
      %p116 = scmp.eq.s32.totalorder %s32, 0
      %p117 = por %p115, %p116
      %s119 = sadd.s32 %s118, 1
      %p122 = scmp.eq.s32.totalorder %s26, 3
      %p123 = scmp.ne.s32.totalorder %s118, %s120
      %p124 = scmp.eq.s32.totalorder %s26, 0
      %p125 = por %p123, %p124
      %p126 = scmp.ne.s32.totalorder %s118, %s120
      %p127 = scmp.eq.s32.totalorder %s31, 3
      %p128 = por %p126, %p127
      %p129 = scmp.ne.s32.totalorder %s120, %s121
      %p130 = scmp.eq.s32.totalorder %s31, 0
      %p131 = por %p129, %p130
      %p132 = scmp.ne.s32.totalorder %s120, %s121
      %p133 = scmp.eq.s32.totalorder %s32, 3
      %p134 = por %p132, %p133
      %p136 = scmp.ne.s32.totalorder %s121, %s135
      %p137 = scmp.eq.s32.totalorder %s32, 0
      %p138 = por %p136, %p137
      %s140 = sadd.s32 %s139, 1
      %p143 = scmp.eq.s32.totalorder %s26, 3
      %p144 = scmp.ne.s32.totalorder %s139, %s141
      %p145 = scmp.eq.s32.totalorder %s26, 0
      %p146 = por %p144, %p145
      %p147 = scmp.ne.s32.totalorder %s139, %s141
      %p148 = scmp.eq.s32.totalorder %s31, 3
      %p149 = por %p147, %p148
      %p150 = scmp.ne.s32.totalorder %s141, %s142
      %p151 = scmp.eq.s32.totalorder %s31, 0
      %p152 = por %p150, %p151
      %p153 = scmp.ne.s32.totalorder %s141, %s142
      %p154 = scmp.eq.s32.totalorder %s32, 3
      %p155 = por %p153, %p154
      %p157 = scmp.ne.s32.totalorder %s142, %s156
      %p158 = scmp.eq.s32.totalorder %s32, 0
      %p159 = por %p157, %p158
      %s161 = sadd.s32 %s160, 1
      %p164 = scmp.eq.s32.totalorder %s26, 3
      %p165 = scmp.ne.s32.totalorder %s160, %s162
      %p166 = scmp.eq.s32.totalorder %s26, 0
      %p167 = por %p165, %p166
      %p168 = scmp.ne.s32.totalorder %s160, %s162
      %p169 = scmp.eq.s32.totalorder %s31, 3
      %p170 = por %p168, %p169
      %p171 = scmp.ne.s32.totalorder %s162, %s163
      %p172 = scmp.eq.s32.totalorder %s31, 0
      %p173 = por %p171, %p172
      %p174 = scmp.ne.s32.totalorder %s162, %s163
      %p175 = scmp.eq.s32.totalorder %s32, 3
      %p176 = por %p174, %p175
      %p178 = scmp.ne.s32.totalorder %s163, %s177
      %p179 = scmp.eq.s32.totalorder %s32, 0
      %p180 = por %p178, %p179
      %s181 = ssub.s32 %s33, %s45
      %p182 = scmp.eq.s32.totalorder %s181, 0
      %s184 = sadd.s32 %s183, 1
      %s185 = scalar_select %p182, %s183, %s184
      %p188 = pneg %p182
      %p189 = scmp.eq.s32.totalorder %s26, 3
      %p190 = por %p188, %p189
      %p191 = scmp.ne.s32.totalorder %s183, %s186
      %p192 = scmp.eq.s32.totalorder %s26, 0
      %p193 = por %p191, %p192
      %p194 = scmp.ne.s32.totalorder %s183, %s186
      %p195 = scmp.eq.s32.totalorder %s31, 3
      %p196 = por %p194, %p195
      %p197 = scmp.ne.s32.totalorder %s186, %s187
      %p198 = scmp.eq.s32.totalorder %s31, 0
      %p199 = por %p197, %p198
      %p200 = scmp.ne.s32.totalorder %s186, %s187
      %p201 = scmp.eq.s32.totalorder %s32, 3
      %p202 = por %p200, %p201
      %p204 = scmp.ne.s32.totalorder %s187, %s203
      %p205 = scmp.eq.s32.totalorder %s32, 0
      %p206 = por %p204, %p205
      %p207 = scmp.le.s32.totalorder 1, %s26
      %p208 = scmp.lt.s32.totalorder %s26, 5
      %p209 = pnand %p207, %p208
      %p210 = pneg %p209
      // Predicated region
      $region9: #{tpu_custom_call.1} parent=5 // pred_check
        _
      $region10: #{tpu_custom_call.1} parent=5 // pred_check_branch
        %212 = sbr.rel (%p209) target = $region12
      $region11: #{tpu_custom_call.1} parent=5 // pred_region
        %s213 = ssub.s32 %s26, 1
        // Predicated region
        $region13: #{tpu_custom_call.1} parent=11 // pred_check
          %p214 = pneg %p89
        $region14: #{tpu_custom_call.1} parent=11 // pred_check_branch
          %216 = sbr.rel (%p214) target = $region16
        $region15: #{tpu_custom_call.1} parent=11 // pred_region
          _
        $region16: #{tpu_custom_call.1} parent=11 // pred_fallthru
          _
        // Predicated region
        $region17: #{tpu_custom_call.1} parent=11 // pred_check
          %p217 = pneg %p110
        $region18: #{tpu_custom_call.1} parent=11 // pred_check_branch
          %219 = sbr.rel (%p217) target = $region20
        $region19: #{tpu_custom_call.1} parent=11 // pred_region
          %221 = vsyncadd [#allocation5], 0
          %s222 = sshll.u32 %s3, 4
          %s223 = int_to_ptr.hbm [resolvable:$true] %s222
          %s224 = sshll.u32 [#allocation4], 4
          %s225 = int_to_ptr.vmem [resolvable:$true] %s224
          %230 = dma.hbm_to_vmem [thread:$0]  %s223, 1024, %s225, [#allocation5], 64, 64, 4
        $region20: #{tpu_custom_call.1} parent=11 // pred_fallthru
          _
        // Predicated region
        $region21: #{tpu_custom_call.1} parent=11 // pred_check
          %p231 = pneg %p131
        $region22: #{tpu_custom_call.1} parent=11 // pred_check_branch
          %233 = sbr.rel (%p231) target = $region24
        $region23: #{tpu_custom_call.1} parent=11 // pred_region
          _
        $region24: #{tpu_custom_call.1} parent=11 // pred_fallthru
          _
        // Predicated region
        $region25: #{tpu_custom_call.1} parent=11 // pred_check
          %p234 = pneg %p152
        $region26: #{tpu_custom_call.1} parent=11 // pred_check_branch
          %236 = sbr.rel (%p234) target = $region28
        $region27: #{tpu_custom_call.1} parent=11 // pred_region
          %238 = vsyncadd [#allocation8], 0
          %s239 = sshll.u32 %s5, 4
          %s240 = int_to_ptr.hbm [resolvable:$true] %s239
          %s241 = sshll.u32 [#allocation7], 4
          %s242 = int_to_ptr.vmem [resolvable:$true] %s241
          %247 = dma.hbm_to_vmem [thread:$0]  %s240, 1024, %s242, [#allocation8], 64, 64, 4
        $region28: #{tpu_custom_call.1} parent=11 // pred_fallthru
          _
        // Predicated region
        $region29: #{tpu_custom_call.1} parent=11 // pred_check
          %p248 = pneg %p173
        $region30: #{tpu_custom_call.1} parent=11 // pred_check_branch
          %250 = sbr.rel (%p248) target = $region32
        $region31: #{tpu_custom_call.1} parent=11 // pred_region
          _
        $region32: #{tpu_custom_call.1} parent=11 // pred_fallthru
          _
      $region12: #{tpu_custom_call.1} parent=5 // pred_fallthru
        _
      %p251 = scmp.lt.s32.totalorder %s26, 4
      // Predicated region
      $region33: #{tpu_custom_call.1} parent=5 // pred_check
        %p252 = pneg %p251
      $region34: #{tpu_custom_call.1} parent=5 // pred_check_branch
        %254 = sbr.rel (%p252) target = $region36
      $region35: #{tpu_custom_call.1} parent=5 // pred_region
        // Predicated region
        $region37: #{tpu_custom_call.1} parent=35 // pred_check
          %p255 = pneg %p62
        $region38: #{tpu_custom_call.1} parent=35 // pred_check_branch
          %257 = sbr.rel (%p255) target = $region40
        $region39: #{tpu_custom_call.1} parent=35 // pred_region
          %s258 = smul.u32 %s33, 2
          %s259 = sadd.s32 %s258, %s34
          %s260 = smul.u32 2, %s259
          %p261 = scmp.lt.s32.totalorder %s260, 7
          %s262 = scalar_select %p261, %s260, 7
          %s263 = smul.addr %s262, 4
          %s264 = scalar_lea.vmem %s1, %s263
          %s265 = smul.u32 %s33, 2
          %s266 = sadd.s32 %s265, %s34
          %s267 = smul.u32 2, %s266
        $region40: #{tpu_custom_call.1} parent=35 // pred_fallthru
          _
      $region36: #{tpu_custom_call.1} parent=5 // pred_fallthru
        _
      %p268 = scmp.le.s32.totalorder 1, %s26
      %p269 = scmp.lt.s32.totalorder %s26, 5
      %p270 = pnand %p268, %p269
      %p271 = pneg %p270
      // Predicated region
      $region41: #{tpu_custom_call.1} parent=5 // pred_check
        _
      $region42: #{tpu_custom_call.1} parent=5 // pred_check_branch
        %273 = sbr.rel (%p270) target = $region44
      $region43: #{tpu_custom_call.1} parent=5 // pred_region
        %s274 = ssub.s32 %s26, 1
        // Predicated region
        $region45: #{tpu_custom_call.1} parent=43 // pred_check
          %p275 = pneg %p110
        $region46: #{tpu_custom_call.1} parent=43 // pred_check_branch
          %277 = sbr.rel (%p275) target = $region48
        $region47: #{tpu_custom_call.1} parent=43 // pred_region
          %279 = dma.done [#allocation5], 1024
        $region48: #{tpu_custom_call.1} parent=43 // pred_fallthru
          _
        // Predicated region
        $region49: #{tpu_custom_call.1} parent=43 // pred_check
          %p280 = pneg %p152
        $region50: #{tpu_custom_call.1} parent=43 // pred_check_branch
          %282 = sbr.rel (%p280) target = $region52
        $region51: #{tpu_custom_call.1} parent=43 // pred_region
          %284 = dma.done [#allocation8], 1024
        $region52: #{tpu_custom_call.1} parent=43 // pred_fallthru
          _
        %s285 = smul.u32 %s35, 2
        %s286 = sadd.s32 %s285, %s36
        %s287 = smul.u32 2, %s286
        %p288 = scmp.lt.s32.totalorder %s287, 7
        %s289 = scalar_select %p288, %s287, 7
        %s290 = smul.addr %s289, 4
        %s291 = scalar_lea.vmem %s1, %s290
        %p292 = pneg %p68
        %p293 = pneg %p65
        %p294 = pneg %p89
        %p295 = pneg %p86
        %p296 = pneg %p110
        %p297 = pneg %p107
        %p298 = pneg %p131
        %p299 = pneg %p128
        %p300 = pneg %p152
        %p301 = pneg %p149
        %p302 = pneg %p173
        %p303 = pneg %p170
        %p304 = pneg %p199
        %p305 = pneg %p196
        %s306 = sand.u32 %s186, 1
        %s307 = scalar_lea.sflag [#allocation6], %s306
        %s308 = sand.u32 %s186, 1
        %s309 = smul.addr %s308, 8
        %s310 = scalar_lea.vmem [#allocation9], %s309
        %s311 = smul.u32 %s35, 2
        %s312 = sadd.s32 %s311, %s36
        %s313 = smul.u32 2, %s312
        %p314 = scmp.lt.s32.totalorder %s313, 7
        %s315 = scalar_select %p314, %s313, 7
        %s316 = smul.addr %s315, 4
        %s317 = scalar_lea.vmem %s1, %s316
        %s318 = smul.u32 %s35, 2
        %s319 = sadd.s32 %s318, %s36
        %s320 = smul.u32 2, %s319
        %s322 = smul.u32 %s35, 2
        %s323 = sadd.s32 %s322, %s36
        %s324 = smul.u32 %s323, 16
        %s325 = sadd.s32 %s324, 16
        %p326 = scmp.eq.s32.totalorder %s36, 0
        // Predicated region
        $region53: #{tpu_custom_call.1} parent=43 // pred_check
          %p327 = pneg %p326
        $region54: #{tpu_custom_call.1} parent=43 // pred_check_branch
          %329 = sbr.rel (%p327) target = $region56
        $region55: #{tpu_custom_call.1} parent=43 // pred_region
          %330 = vst [vmem:[%s310] sm:$0xff] 0.0
        $region56: #{tpu_custom_call.1} parent=43 // pred_fallthru
          _
        %v331 = vld [vmem:[%s317] sm:$0xf]
        %v332 = vld [vmem:[%s317 + $0x4] sm:$0xf]
        %v333 = vld [vmem:[%s2] sm:$0xf]
        %v336 = vunpack.c.l.b16 %v331
        %v337 = vunpack.c.l.b16 %v332
        %v338 = vpack.c.b16 %v337, %v336
        %vm339 = vcmask 64512
        %v341 = vsel %vm339, %v338, 0
        %vm343 = vcmask 1043456
        %v345 = vsel %vm343, %v333, 0
        %347 = vmatpush.bf16.msra.mxu0 0
        %348 = vmatpush.bf16.msra.mxu0 0
        %349 = vmatpush.bf16.msra.mxu0 0
        %350 = vmatpush.bf16.msra.mxu0 0
        %351 = vmatpush.bf16.msra.mxu0 0
        %352 = vmatpush.bf16.msra.mxu0 0
        %353 = vmatpush.bf16.msra.mxu0 0
        %354 = vmatpush.bf16.msra.mxu0 %v345
        %355 = vmatmul.bf16.gmra.mxu0 %v341
        %v356 = vpop.f32.mrf.mxu0
        %v357 = vadd.f32 0.0, %v356
        %v358 = vpop.f32.mrf.mxu0
        %v359 = vadd.f32 0.0, %v358
        %360 = vdwg.mxu0
        %v361 = vmax.f32 %v357, 0.0
        %v362 = vmax.f32 %v359, 0.0
        %v363 = vpack.c.bf16 %v362, %v361
        %v364 = vld [vmem:[#allocation4] sm:$0xf]
        %v365 = vld [vmem:[#allocation4 + $0x4] sm:$0xf]
        %v366 = vld [vmem:[#allocation4 + $0x8] sm:$0xf]
        %v367 = vld [vmem:[#allocation4 + $0xc] sm:$0xf]
        %v368 = vld [vmem:[#allocation4 + $0x10] sm:$0xf]
        %v369 = vld [vmem:[#allocation4 + $0x14] sm:$0xf]
        %v370 = vld [vmem:[#allocation4 + $0x18] sm:$0xf]
        %v371 = vld [vmem:[#allocation4 + $0x1c] sm:$0xf]
        %v372 = vld [vmem:[#allocation4 + $0x20] sm:$0xf]
        %v373 = vld [vmem:[#allocation4 + $0x24] sm:$0xf]
        %v374 = vld [vmem:[#allocation4 + $0x28] sm:$0xf]
        %v375 = vld [vmem:[#allocation4 + $0x2c] sm:$0xf]
        %v376 = vld [vmem:[#allocation4 + $0x30] sm:$0xf]
        %v377 = vld [vmem:[#allocation4 + $0x34] sm:$0xf]
        %v378 = vld [vmem:[#allocation4 + $0x38] sm:$0xf]
        %v379 = vld [vmem:[#allocation4 + $0x3c] sm:$0xf]
        %v380 = vld [vmem:[%s4] sm:$0x1]
        %v382 = vperm.slane %v380, 0
        %v400 = vunpack.c.l.b16 %v364
        %v401 = vunpack.c.l.b16 %v365
        %v402 = vunpack.c.l.b16 %v366
        %v403 = vunpack.c.l.b16 %v367
        %v404 = vunpack.c.l.b16 %v368
        %v405 = vunpack.c.l.b16 %v369
        %v406 = vunpack.c.l.b16 %v370
        %v407 = vunpack.c.l.b16 %v371
        %v408 = vunpack.c.l.b16 %v372
        %v409 = vunpack.c.l.b16 %v373
        %v410 = vunpack.c.l.b16 %v374
        %v411 = vunpack.c.l.b16 %v375
        %v412 = vunpack.c.l.b16 %v376
        %v413 = vunpack.c.l.b16 %v377
        %v414 = vunpack.c.l.b16 %v378
        %v415 = vunpack.c.l.b16 %v379
        %v416 = vpack.c.b16 %v401, %v400
        %v417 = vpack.c.b16 %v403, %v402
        %v418 = vpack.c.b16 %v405, %v404
        %v419 = vpack.c.b16 %v407, %v406
        %v420 = vpack.c.b16 %v409, %v408
        %v421 = vpack.c.b16 %v411, %v410
        %v422 = vpack.c.b16 %v413, %v412
        %v423 = vpack.c.b16 %v415, %v414
        %432 = vmatpush.bf16.msra.mxu0 %v423
        %433 = vmatpush.bf16.msra.mxu0 %v422
        %434 = vmatpush.bf16.msra.mxu0 %v421
        %435 = vmatpush.bf16.msra.mxu0 %v420
        %436 = vmatpush.bf16.msra.mxu0 %v419
        %437 = vmatpush.bf16.msra.mxu0 %v418
        %438 = vmatpush.bf16.msra.mxu0 %v417
        %439 = vmatpush.bf16.msra.mxu0 %v416
        %440 = vmatmul.bf16.gmra.mxu0 %v363
        %v441 = vpop.f32.mrf.mxu0
        %v442 = vadd.f32 %v382, %v441
        %v443 = vpop.f32.mrf.mxu0
        %v444 = vadd.f32 %v382, %v443
        %445 = vdwg.mxu0
        %v446 = vmax.f32 %v442, 0.0
        %v447 = vmax.f32 %v444, 0.0
        %v448 = vpack.c.bf16 %v447, %v446
        %v449 = vld [vmem:[#allocation7] sm:$0xf]
        %v450 = vld [vmem:[#allocation7 + $0x4] sm:$0xf]
        %v451 = vld [vmem:[#allocation7 + $0x8] sm:$0xf]
        %v452 = vld [vmem:[#allocation7 + $0xc] sm:$0xf]
        %v453 = vld [vmem:[#allocation7 + $0x10] sm:$0xf]
        %v454 = vld [vmem:[#allocation7 + $0x14] sm:$0xf]
        %v455 = vld [vmem:[#allocation7 + $0x18] sm:$0xf]
        %v456 = vld [vmem:[#allocation7 + $0x1c] sm:$0xf]
        %v457 = vld [vmem:[#allocation7 + $0x20] sm:$0xf]
        %v458 = vld [vmem:[#allocation7 + $0x24] sm:$0xf]
        %v459 = vld [vmem:[#allocation7 + $0x28] sm:$0xf]
        %v460 = vld [vmem:[#allocation7 + $0x2c] sm:$0xf]
        %v461 = vld [vmem:[#allocation7 + $0x30] sm:$0xf]
        %v462 = vld [vmem:[#allocation7 + $0x34] sm:$0xf]
        %v463 = vld [vmem:[#allocation7 + $0x38] sm:$0xf]
        %v464 = vld [vmem:[#allocation7 + $0x3c] sm:$0xf]
        %v465 = vld [vmem:[%s6] sm:$0x1]
        %v467 = vperm.slane %v465, 0
        %v485 = vunpack.c.l.b16 %v449
        %v486 = vunpack.c.l.b16 %v450
        %v487 = vunpack.c.l.b16 %v451
        %v488 = vunpack.c.l.b16 %v452
        %v489 = vunpack.c.l.b16 %v453
        %v490 = vunpack.c.l.b16 %v454
        %v491 = vunpack.c.l.b16 %v455
        %v492 = vunpack.c.l.b16 %v456
        %v493 = vunpack.c.l.b16 %v457
        %v494 = vunpack.c.l.b16 %v458
        %v495 = vunpack.c.l.b16 %v459
        %v496 = vunpack.c.l.b16 %v460
        %v497 = vunpack.c.l.b16 %v461
        %v498 = vunpack.c.l.b16 %v462
        %v499 = vunpack.c.l.b16 %v463
        %v500 = vunpack.c.l.b16 %v464
        %v501 = vpack.c.b16 %v486, %v485
        %v502 = vpack.c.b16 %v488, %v487
        %v503 = vpack.c.b16 %v490, %v489
        %v504 = vpack.c.b16 %v492, %v491
        %v505 = vpack.c.b16 %v494, %v493
        %v506 = vpack.c.b16 %v496, %v495
        %v507 = vpack.c.b16 %v498, %v497
        %v508 = vpack.c.b16 %v500, %v499
        %517 = vmatpush.bf16.msra.mxu0 %v508
        %518 = vmatpush.bf16.msra.mxu0 %v507
        %519 = vmatpush.bf16.msra.mxu0 %v506
        %520 = vmatpush.bf16.msra.mxu0 %v505
        %521 = vmatpush.bf16.msra.mxu0 %v504
        %522 = vmatpush.bf16.msra.mxu0 %v503
        %523 = vmatpush.bf16.msra.mxu0 %v502
        %524 = vmatpush.bf16.msra.mxu0 %v501
        %525 = vmatmul.bf16.gmra.mxu0 %v448
        %v526 = vpop.f32.mrf.mxu0
        %v527 = vadd.f32 %v467, %v526
        %v528 = vpop.f32.mrf.mxu0
        %v529 = vadd.f32 %v467, %v528
        %530 = vdwg.mxu0
        %v531 = vmax.f32 %v527, 0.0
        %v532 = vmax.f32 %v529, 0.0
        %v533 = vlaneseq
        %v534 = vshrl.u32 %v533, 7
        %v535 = vadd.s32 %v534, 8
        %v536 = vstv %s324
        %v537 = vadd.s32 %v536, %v534
        %v538 = vadd.s32 %v536, %v535
        %s539 = sld [smem:[#allocation3]]
        %s540 = sld [smem:[#allocation3 + $0x1]]
        %p541 = scmp.lt.s32.totalorder %s539, %s325
        %p542 = scmp.gt.s32.totalorder %s540, %s324
        %p543 = pnand %p541, %p542
        %p544 = pneg %p543
        // Predicated region
        $region57: #{tpu_custom_call.1} parent=43 // pred_check
          _
        $region58: #{tpu_custom_call.1} parent=43 // pred_check_branch
          %546 = sbr.rel (%p543) target = $region60
        $region59: #{tpu_custom_call.1} parent=43 // pred_region
          %v547 = vstv %s539
          %vm548 = vcmp.ge.s32.totalorder %v537, %v547
          %vm549 = vcmp.ge.s32.totalorder %v538, %v547
          %v550 = vstv %s540
          %vm551 = vcmp.lt.s32.totalorder %v537, %v550
          %vm552 = vcmp.lt.s32.totalorder %v538, %v550
          %vm553 = vmand %vm548, %vm551
          %vm554 = vmand %vm549, %vm552
          %v555 = vsel %vm553, 1, 0
          %v556 = vsel %vm554, 1, 0
          %vm557 = vcmp.eq.s32.totalorder %v555, 1
          %vm558 = vcmp.eq.s32.totalorder %v556, 1
          %v559 = vsel %vm557, %v531, 0.0
          %v560 = vsel %vm558, %v532, 0.0
          %v561 = vmax.f32 %v559, %v560
          %v562 = vrot.slane %v561, 4
          %v563 = vmax.f32 %v561, %v562
          %v564 = vrot.slane %v563, 2
          %v565 = vmax.f32 %v563, %v564
          %v566 = vrot.slane %v565, 1
          %v567 = vmax.f32 %v565, %v566
          %v568 = vld [vmem:[%s310] sm:$0x1]
          %v569 = vmax.f32 %v568, %v567
          %570 = vst [vmem:[%s310] sm:$0x1] %v569
        $region60: #{tpu_custom_call.1} parent=43 // pred_fallthru
          _
        %s571 = sld [smem:[#allocation3 + $0x1]]
        %s572 = sld [smem:[#allocation3 + $0x2]]
        %p573 = scmp.lt.s32.totalorder %s571, %s325
        %p574 = scmp.gt.s32.totalorder %s572, %s324
        %p575 = pnand %p573, %p574
        %p576 = pneg %p575
        // Predicated region
        $region61: #{tpu_custom_call.1} parent=43 // pred_check
          _
        $region62: #{tpu_custom_call.1} parent=43 // pred_check_branch
          %578 = sbr.rel (%p575) target = $region64
        $region63: #{tpu_custom_call.1} parent=43 // pred_region
          %v579 = vstv %s571
          %vm580 = vcmp.ge.s32.totalorder %v537, %v579
          %vm581 = vcmp.ge.s32.totalorder %v538, %v579
          %v582 = vstv %s572
          %vm583 = vcmp.lt.s32.totalorder %v537, %v582
          %vm584 = vcmp.lt.s32.totalorder %v538, %v582
          %vm585 = vmand %vm580, %vm583
          %vm586 = vmand %vm581, %vm584
          %v587 = vsel %vm585, 1, 0
          %v588 = vsel %vm586, 1, 0
          %vm589 = vcmp.eq.s32.totalorder %v587, 1
          %vm590 = vcmp.eq.s32.totalorder %v588, 1
          %v591 = vsel %vm589, %v531, 0.0
          %v592 = vsel %vm590, %v532, 0.0
          %v593 = vmax.f32 %v591, %v592
          %v594 = vrot.slane %v593, 4
          %v595 = vmax.f32 %v593, %v594
          %v596 = vrot.slane %v595, 2
          %v597 = vmax.f32 %v595, %v596
          %v598 = vrot.slane %v597, 1
          %v599 = vmax.f32 %v597, %v598
          %v600 = vld [vmem:[%s310 + $0x1] sm:$0x1]
          %v601 = vmax.f32 %v600, %v599
          %602 = vst [vmem:[%s310 + $0x1] sm:$0x1] %v601
        $region64: #{tpu_custom_call.1} parent=43 // pred_fallthru
          _
        %s603 = sand.u32 %s186, 1
        %s604 = scalar_lea.sflag [#allocation6], %s603
        %s605 = sand.u32 %s186, 1
        %s606 = smul.addr %s605, 8
        %s607 = scalar_lea.vmem [#allocation9], %s606
        // Predicated region
        $region65: #{tpu_custom_call.1} parent=43 // pred_check
          %p608 = pneg %p196
        $region66: #{tpu_custom_call.1} parent=43 // pred_check_branch
          %610 = sbr.rel (%p608) target = $region68
        $region67: #{tpu_custom_call.1} parent=43 // pred_region
          %612 = vsyncadd %s604, 0
          %s613 = smul.addr %s35, 8
          %s614 = scalar_lea.hbm %s7, %s613
          %s616 = sshll.u32 %s607, 4
          %s617 = int_to_ptr.vmem [resolvable:$true] %s616
          %s618 = sshll.u32 %s614, 4
          %s619 = int_to_ptr.hbm [resolvable:$true] %s618
          %621 = dma.vmem_to_hbm [thread:$0]  %s617, 128, %s619, %s604
        $region68: #{tpu_custom_call.1} parent=43 // pred_fallthru
          _
      $region44: #{tpu_custom_call.1} parent=5 // pred_fallthru
        _
      %p622 = scmp.le.s32.totalorder 2, %s26
      // Predicated region
      $region69: #{tpu_custom_call.1} parent=5 // pred_check
        %p623 = pneg %p622
      $region70: #{tpu_custom_call.1} parent=5 // pred_check_branch
        %625 = sbr.rel (%p623) target = $region72
      $region71: #{tpu_custom_call.1} parent=5 // pred_region
        %s626 = ssub.s32 %s26, 2
        // Predicated region
        $region73: #{tpu_custom_call.1} parent=71 // pred_check
          %p627 = pneg %p202
        $region74: #{tpu_custom_call.1} parent=71 // pred_check_branch
          %629 = sbr.rel (%p627) target = $region76
        $region75: #{tpu_custom_call.1} parent=71 // pred_region
          %s630 = sand.u32 %s187, 1
          %s631 = scalar_lea.sflag [#allocation6], %s630
          %s632 = sand.u32 %s187, 1
          %s633 = smul.addr %s632, 8
          %s634 = scalar_lea.vmem [#allocation9], %s633
          %636 = dma.done %s631, 128
        $region76: #{tpu_custom_call.1} parent=71 // pred_fallthru
          _
      $region72: #{tpu_custom_call.1} parent=5 // pred_fallthru
        _
    $region6: #{tpu_custom_call.1} parent=1 // loop_footer
      %s30 = sadd.s32 1, %s26
    $region7: #{tpu_custom_call.1} parent=1 // loop_footer_branch
      %25 = sbr.rel target = $region3
    $region8: #{tpu_custom_call.1} parent=1 // loop_exit
      _
    %637 = vsyncpa [#allocation5], 1
    %s638 = scalar_lea.sflag [#allocation5], 1
    %639 = vsyncpa %s638, 1
    %640 = vsyncpa [#allocation8], 1
    %641 = vsyncpa [#allocation6], 1
    %s642 = scalar_lea.sflag [#allocation6], 1
    %643 = vsyncpa %s642, 1

</llo_original>
